<compile_context>
chip_gen: v5e
topology: v5e:2x2
jax: 0.10.0
libtpu: 0.0.40
codegen_flags: <defaults>
</compile_context>

<pallas_src>
import functools

import jax
import jax.numpy as jnp
from jax.experimental import pallas as pl
from jax.experimental.pallas import tpu as pltpu


def _round_up(x, m):
    return ((x + m - 1) // m) * m


# ----------------------------- Pallas kernel ------------------------------- #

def _tail_kernel(x_ref, mask_ref, w1_ref, sh1_ref, w2_ref, sh2_ref,
                 w3_ref, b3_ref, out_ref, *, taps):
    """Fused Tail forward for one block of Nb images (pixels in the lane axis).

    x_ref   : (Cin_p, L)     input, channels in sublanes, L = Nb*H*W lanes
    mask_ref: (9, L)         per-tap border masks ({0,1} f32), grid-invariant
    w1_ref  : (C1_p, 9*Cin_p) bf16 BN-folded 3x3 weights, layer 1
    sh1_ref : (C1_p, 1)      f32 folded conv-bias + BN shift, layer 1
    w2_ref  : (C2_p, 9*C1_p) bf16, layer 2;  sh2_ref: (C2_p, 1) f32
    w3_ref  : (K_p, C2_p)    bf16 1x1 conv;  b3_ref : (K_p, 1) f32
    out_ref : (K_p, L)       f32
    """
    L = x_ref.shape[-1]
    m = mask_ref[...]                                        # (9, L) f32

    def conv3x3_bn_relu(x, w_ref, sh_ref):
        # x: (Cin_p, L) f32 with Cin_p % 8 == 0 -> every tap is a whole
        # sublane group, so the concatenate below is an aligned copy.
        cols = []
        for t, s in enumerate(taps):
            rolled = x if s == 0 else pltpu.roll(x, (-s) % L, axis=1)
            cols.append(rolled * m[t:t + 1])                 # zero padded border
        im2col = jnp.concatenate(cols, axis=0)               # (9*Cin_p, L) f32
        y = jnp.dot(w_ref[...], im2col.astype(jnp.bfloat16),
                    preferred_element_type=jnp.float32)      # MXU, f32 acc
        return jnp.maximum(y + sh_ref[...], 0.0)             # f32 epilogue

    h1 = conv3x3_bn_relu(x_ref[...], w1_ref, sh1_ref)        # (C1_p, L)
    h2 = conv3x3_bn_relu(h1, w2_ref, sh2_ref)                # (C2_p, L)
    y = jnp.dot(w3_ref[...], h2.astype(jnp.bfloat16),
                preferred_element_type=jnp.float32) + b3_ref[...]
    out_ref[...] = y                                         # unmasked store


# ------------------------------ wrapper ------------------------------------ #

def _fold_conv3x3(w_hwio, b, s, t, cin_p, cout_p):
    """Fold bias + eval-mode BN into a (cout_p, 9*cin_p) bf16 weight + f32 shift."""
    kh, kw, ci, co = w_hwio.shape
    scale = s.reshape(-1)
    wp = jnp.zeros((kh, kw, cin_p, cout_p), jnp.float32)
    wp = wp.at[:, :, :ci, :co].set(w_hwio * scale)           # per-out-ch scale
    w2d = jnp.transpose(wp, (3, 0, 1, 2)).reshape(cout_p, kh * kw * cin_p)
    shift = jnp.zeros((cout_p, 1), jnp.float32)
    shift = shift.at[:co, 0].set(b.reshape(-1) * scale + t.reshape(-1))
    return w2d.astype(jnp.bfloat16), shift


def _border_masks(H, W, dil, Nb):
    """(9, Nb*H*W) {0,1} f32 masks; per-image borders so batched lanes don't leak."""
    q = jnp.arange(H * W)
    h, w = q // W, q % W
    rows = []
    for ky in range(3):
        dy = (ky - 1) * dil
        for kx in range(3):
            dx = (kx - 1) * dil
            rows.append((h >= -dy) & (h < H - dy) & (w >= -dx) & (w < W - dx))
    m = jnp.stack(rows, axis=0).astype(jnp.float32)          # (9, H*W)
    return jnp.tile(m, (1, Nb))                              # (9, Nb*H*W)


def tail_forward(x_nchw, params, dilation=1):
    """Tail (scale=1): BB(in,out) -> BB(out,out//2) -> Conv2d(out//2, K, 1)."""
    N, Cin, H, W = x_nchw.shape
    C1 = params["w1"].shape[-1]
    C2 = params["w2"].shape[-1]
    K = params["w3"].shape[-1]
    HW = H * W

    Cin_p, C1_p, C2_p, K_p = (_round_up(c, 8) for c in (Cin, C1, C2, K))

    # Batch Nb images per grid step.  Keep >= 2 parallel steps when possible so
    # both v7x TensorCores get work; otherwise fold everything into one step.
    Nb = N // 2 if (N >= 2 and N % 2 == 0) else 1
    steps = N // Nb
    L = Nb * HW

    # Host-side folding / padding (layout plumbing, done once).
    w1, sh1 = _fold_conv3x3(params["w1"], params["b1"], params["s1"],
                            params["t1"], Cin_p, C1_p)
    w2, sh2 = _fold_conv3x3(params["w2"], params["b2"], params["s2"],
                            params["t2"], C1_p, C2_p)
    w3 = jnp.zeros((K_p, C2_p), jnp.float32)
    w3 = w3.at[:K, :C2].set(jnp.transpose(params["w3"], (1, 0))).astype(jnp.bfloat16)
    b3 = jnp.zeros((K_p, 1), jnp.float32).at[:K, 0].set(params["b3"].reshape(-1))

    # Channels-major, lane-dense input: (Cin_p, N*HW), images contiguous in lanes.
    x = jnp.transpose(x_nchw.reshape(N, Cin, HW), (1, 0, 2)).reshape(Cin, N * HW)
    x = jnp.pad(x, ((0, Cin_p - Cin), (0, 0)))

    mask = _border_masks(H, W, dilation, Nb)                 # (9, L)
    taps = tuple((ky - 1) * dilation * W + (kx - 1) * dilation
                 for ky in range(3) for kx in range(3))

    kernel = functools.partial(_tail_kernel, taps=taps)
    out = pl.pallas_call(
        kernel,
        out_shape=jax.ShapeDtypeStruct((K_p, N * HW), jnp.float32),
        grid=(steps,),
        in_specs=[
            pl.BlockSpec((Cin_p, L), lambda i: (0, i)),
            pl.BlockSpec((9, L), lambda i: (0, 0)),
            pl.BlockSpec((C1_p, 9 * Cin_p), lambda i: (0, 0)),
            pl.BlockSpec((C1_p, 1), lambda i: (0, 0)),
            pl.BlockSpec((C2_p, 9 * C1_p), lambda i: (0, 0)),
            pl.BlockSpec((C2_p, 1), lambda i: (0, 0)),
            pl.BlockSpec((K_p, C2_p), lambda i: (0, 0)),
            pl.BlockSpec((K_p, 1), lambda i: (0, 0)),
        ],
        out_specs=pl.BlockSpec((K_p, L), lambda i: (0, i)),
        compiler_params=pltpu.CompilerParams(
            dimension_semantics=("parallel",)),
    )(x, mask, w1, sh1, w2, sh2, w3, b3)

    # Undo padding / layout: (K_p, N*HW) -> (N, K, H, W).
    out = out.reshape(K_p, N, HW).transpose(1, 0, 2)[:, :K]
    return out.reshape(N, K, H, W)


# -------------------------- parameter construction ------------------------- #

def init_tail_params(key, in_ch, out_ch, n_classes):
    mid = out_ch // 2
    ks = jax.random.split(key, 8)
    eps = 1e-5

    def conv_w(k, kh, kw, ci, co):
        return (jax.random.normal(k, (kh, kw, ci, co), jnp.float32)
                / jnp.sqrt(float(kh * kw * ci)))

    def bn(k, c):
        k1, k2, k3, k4 = jax.random.split(k, 4)
        gamma = 1.0 + 0.1 * jax.random.normal(k1, (1, c), jnp.float32)
        beta = 0.1 * jax.random.normal(k2, (1, c), jnp.float32)
        mean = 0.1 * jax.random.normal(k3, (1, c), jnp.float32)
        var = jnp.abs(jax.random.normal(k4, (1, c), jnp.float32)) + 0.5
        scale = gamma / jnp.sqrt(var + eps)
        shift = beta - mean * scale
        return scale, shift

    p = {}
    p["w1"] = conv_w(ks[0], 3, 3, in_ch, out_ch)
    p["b1"] = 0.05 * jax.random.normal(ks[1], (1, out_ch), jnp.float32)
    p["s1"], p["t1"] = bn(ks[2], out_ch)
    p["w2"] = conv_w(ks[3], 3, 3, out_ch, mid)
    p["b2"] = 0.05 * jax.random.normal(ks[4], (1, mid), jnp.float32)
    p["s2"], p["t2"] = bn(ks[5], mid)
    p["w3"] = conv_w(ks[6], 1, 1, mid, n_classes)[0, 0]        # (mid, K)
    p["b3"] = 0.05 * jax.random.normal(ks[7], (1, n_classes), jnp.float32)
    return p


# --------------------------- pure-JAX reference ----------------------------- #

def _ref_tail(x_nchw, params, dilation=1):
    def conv3x3(x, w, b, d):
        y = jax.lax.conv_general_dilated(
            x, w, window_strides=(1, 1), padding=((d, d), (d, d)),
            rhs_dilation=(d, d), dimension_numbers=("NHWC", "HWIO", "NHWC"))
        return y + b[0]

    x = jnp.transpose(x_nchw, (0, 2, 3, 1))
    h = jnp.maximum(conv3x3(x, params["w1"], params["b1"], dilation)
                    * params["s1"][0] + params["t1"][0], 0.0)
    h = jnp.maximum(conv3x3(h, params["w2"], params["b2"], dilation)
                    * params["s2"][0] + params["t2"][0], 0.0)
    y = jnp.einsum("nhwc,ck->nhwk", h, params["w3"]) + params["b3"][0]
    return jnp.transpose(y, (0, 3, 1, 2))


# --------------------------------- main ------------------------------------ #

if __name__ == "__main__":
    key = jax.random.PRNGKey(0)
    kx, kp = jax.random.split(key)

    N, in_ch, H, W = 2, 4, 16, 16
    out_ch, K = 8, 3

    x = jax.random.normal(kx, (N, in_ch, H, W), jnp.float32)  # NCHW, like torch
    params = init_tail_params(kp, in_ch, out_ch, K)

    out = jax.jit(tail_forward)(x, params)
    out = jax.block_until_ready(out)

    ref = _ref_tail(x, params)
    assert out.shape == (N, K, H, W), out.shape
    # bf16 matmul operands (f32 accumulation) -> slightly loosened tolerance.
    assert jnp.allclose(out, ref, atol=5e-2, rtol=5e-2), \
        float(jnp.max(jnp.abs(out - ref)))

    print("KERNEL_OK")
</pallas_src>

<mosaic_0001>
module attributes {stable_mosaic.version = 11 : i64} {
  func.func @_tail_kernel(%arg0: i32, %arg1: memref<8x256xf32, #tpu.memory_space<vmem>>, %arg2: memref<9x256xf32, #tpu.memory_space<vmem>>, %arg3: memref<8x72xbf16, #tpu.memory_space<vmem>>, %arg4: memref<8x1xf32, #tpu.memory_space<vmem>>, %arg5: memref<8x72xbf16, #tpu.memory_space<vmem>>, %arg6: memref<8x1xf32, #tpu.memory_space<vmem>>, %arg7: memref<8x8xbf16, #tpu.memory_space<vmem>>, %arg8: memref<8x1xf32, #tpu.memory_space<vmem>>, %arg9: memref<8x256xf32, #tpu.memory_space<vmem>>) attributes {dimension_semantics = [#tpu.dimension_semantics<parallel>], iteration_bounds = array<i64: 2>, scalar_prefetch = 0 : i64, scratch_operands = 0 : i64, tpu.core_type = #tpu.core_type<tc>, window_params = [{transform_indices = @transform_0, window_bounds = array<i64: 8, 256>}, {pipeline_mode = #tpu.pipeline_mode<synchronous>, transform_indices = @transform_1, window_bounds = array<i64: 9, 256>}, {pipeline_mode = #tpu.pipeline_mode<synchronous>, transform_indices = @transform_2, window_bounds = array<i64: 8, 72>}, {pipeline_mode = #tpu.pipeline_mode<synchronous>, transform_indices = @transform_3, window_bounds = array<i64: 8, 1>}, {pipeline_mode = #tpu.pipeline_mode<synchronous>, transform_indices = @transform_4, window_bounds = array<i64: 8, 72>}, {pipeline_mode = #tpu.pipeline_mode<synchronous>, transform_indices = @transform_5, window_bounds = array<i64: 8, 1>}, {pipeline_mode = #tpu.pipeline_mode<synchronous>, transform_indices = @transform_6, window_bounds = array<i64: 8, 8>}, {pipeline_mode = #tpu.pipeline_mode<synchronous>, transform_indices = @transform_7, window_bounds = array<i64: 8, 1>}, {transform_indices = @transform_8, window_bounds = array<i64: 8, 256>}]} {
    %c0 = arith.constant 0 : index
    %c0_0 = arith.constant 0 : index
    %0 = vector.load %arg2[%c0, %c0_0] : memref<9x256xf32, #tpu.memory_space<vmem>>, vector<9x256xf32>
    %c0_1 = arith.constant 0 : index
    %c0_2 = arith.constant 0 : index
    %1 = vector.load %arg1[%c0_1, %c0_2] : memref<8x256xf32, #tpu.memory_space<vmem>>, vector<8x256xf32>
    %c17_i32 = arith.constant 17 : i32
    %2 = tpu.dynamic_rotate %1 by %c17_i32 dim 1 : vector<8x256xf32>, i32 -> vector<8x256xf32>
    %3 = vector.extract_strided_slice %0 {offsets = [0, 0], sizes = [1, 256], strides = [1, 1]} : vector<9x256xf32> to vector<1x256xf32>
    %4 = vector.broadcast %3 : vector<1x256xf32> to vector<8x256xf32>
    %5 = arith.mulf %2, %4 : vector<8x256xf32>
    %c16_i32 = arith.constant 16 : i32
    %6 = tpu.dynamic_rotate %1 by %c16_i32 dim 1 : vector<8x256xf32>, i32 -> vector<8x256xf32>
    %7 = vector.extract_strided_slice %0 {offsets = [1, 0], sizes = [1, 256], strides = [1, 1]} : vector<9x256xf32> to vector<1x256xf32>
    %8 = vector.broadcast %7 : vector<1x256xf32> to vector<8x256xf32>
    %9 = arith.mulf %6, %8 : vector<8x256xf32>
    %c15_i32 = arith.constant 15 : i32
    %10 = tpu.dynamic_rotate %1 by %c15_i32 dim 1 : vector<8x256xf32>, i32 -> vector<8x256xf32>
    %11 = vector.extract_strided_slice %0 {offsets = [2, 0], sizes = [1, 256], strides = [1, 1]} : vector<9x256xf32> to vector<1x256xf32>
    %12 = vector.broadcast %11 : vector<1x256xf32> to vector<8x256xf32>
    %13 = arith.mulf %10, %12 : vector<8x256xf32>
    %c1_i32 = arith.constant 1 : i32
    %14 = tpu.dynamic_rotate %1 by %c1_i32 dim 1 : vector<8x256xf32>, i32 -> vector<8x256xf32>
    %15 = vector.extract_strided_slice %0 {offsets = [3, 0], sizes = [1, 256], strides = [1, 1]} : vector<9x256xf32> to vector<1x256xf32>
    %16 = vector.broadcast %15 : vector<1x256xf32> to vector<8x256xf32>
    %17 = arith.mulf %14, %16 : vector<8x256xf32>
    %18 = vector.extract_strided_slice %0 {offsets = [4, 0], sizes = [1, 256], strides = [1, 1]} : vector<9x256xf32> to vector<1x256xf32>
    %19 = vector.broadcast %18 : vector<1x256xf32> to vector<8x256xf32>
    %20 = arith.mulf %1, %19 : vector<8x256xf32>
    %c255_i32 = arith.constant 255 : i32
    %21 = tpu.dynamic_rotate %1 by %c255_i32 dim 1 : vector<8x256xf32>, i32 -> vector<8x256xf32>
    %22 = vector.extract_strided_slice %0 {offsets = [5, 0], sizes = [1, 256], strides = [1, 1]} : vector<9x256xf32> to vector<1x256xf32>
    %23 = vector.broadcast %22 : vector<1x256xf32> to vector<8x256xf32>
    %24 = arith.mulf %21, %23 : vector<8x256xf32>
    %c241_i32 = arith.constant 241 : i32
    %25 = tpu.dynamic_rotate %1 by %c241_i32 dim 1 : vector<8x256xf32>, i32 -> vector<8x256xf32>
    %26 = vector.extract_strided_slice %0 {offsets = [6, 0], sizes = [1, 256], strides = [1, 1]} : vector<9x256xf32> to vector<1x256xf32>
    %27 = vector.broadcast %26 : vector<1x256xf32> to vector<8x256xf32>
    %28 = arith.mulf %25, %27 : vector<8x256xf32>
    %c240_i32 = arith.constant 240 : i32
    %29 = tpu.dynamic_rotate %1 by %c240_i32 dim 1 : vector<8x256xf32>, i32 -> vector<8x256xf32>
    %30 = vector.extract_strided_slice %0 {offsets = [7, 0], sizes = [1, 256], strides = [1, 1]} : vector<9x256xf32> to vector<1x256xf32>
    %31 = vector.broadcast %30 : vector<1x256xf32> to vector<8x256xf32>
    %32 = arith.mulf %29, %31 : vector<8x256xf32>
    %c239_i32 = arith.constant 239 : i32
    %33 = tpu.dynamic_rotate %1 by %c239_i32 dim 1 : vector<8x256xf32>, i32 -> vector<8x256xf32>
    %34 = vector.extract_strided_slice %0 {offsets = [8, 0], sizes = [1, 256], strides = [1, 1]} : vector<9x256xf32> to vector<1x256xf32>
    %35 = vector.broadcast %34 : vector<1x256xf32> to vector<8x256xf32>
    %36 = arith.mulf %33, %35 : vector<8x256xf32>
    %37 = tpu.concatenate %5, %9, %13, %17, %20, %24, %28, %32, %36 in 0 : vector<8x256xf32>, vector<8x256xf32>, vector<8x256xf32>, vector<8x256xf32>, vector<8x256xf32>, vector<8x256xf32>, vector<8x256xf32>, vector<8x256xf32>, vector<8x256xf32> -> vector<72x256xf32>
    %c0_3 = arith.constant 0 : index
    %c0_4 = arith.constant 0 : index
    %38 = vector.load %arg3[%c0_3, %c0_4] : memref<8x72xbf16, #tpu.memory_space<vmem>>, vector<8x72xbf16>
    %39 = arith.truncf %37 : vector<72x256xf32> to vector<72x256xbf16>
    %cst = arith.constant dense<0.000000e+00> : vector<8x256xf32>
    %40 = tpu.matmul %38, %39, %cst {dimension_numbers = #tpu.dot_dimension_numbers<[1], [0], [0], [1], [0, 0, 1, 1], [], []>} : vector<8x72xbf16>, vector<72x256xbf16>, vector<8x256xf32> -> vector<8x256xf32>
    %c0_5 = arith.constant 0 : index
    %c0_6 = arith.constant 0 : index
    %41 = vector.load %arg4[%c0_5, %c0_6] : memref<8x1xf32, #tpu.memory_space<vmem>>, vector<8x1xf32>
    %42 = vector.broadcast %41 : vector<8x1xf32> to vector<8x256xf32>
    %43 = arith.addf %40, %42 : vector<8x256xf32>
    %cst_7 = arith.constant 0.000000e+00 : f32
    %44 = vector.broadcast %cst_7 : f32 to vector<8x256xf32>
    %45 = arith.maximumf %43, %44 : vector<8x256xf32>
    %c17_i32_8 = arith.constant 17 : i32
    %46 = tpu.dynamic_rotate %45 by %c17_i32_8 dim 1 : vector<8x256xf32>, i32 -> vector<8x256xf32>
    %47 = vector.extract_strided_slice %0 {offsets = [0, 0], sizes = [1, 256], strides = [1, 1]} : vector<9x256xf32> to vector<1x256xf32>
    %48 = vector.broadcast %47 : vector<1x256xf32> to vector<8x256xf32>
    %49 = arith.mulf %46, %48 : vector<8x256xf32>
    %c16_i32_9 = arith.constant 16 : i32
    %50 = tpu.dynamic_rotate %45 by %c16_i32_9 dim 1 : vector<8x256xf32>, i32 -> vector<8x256xf32>
    %51 = vector.extract_strided_slice %0 {offsets = [1, 0], sizes = [1, 256], strides = [1, 1]} : vector<9x256xf32> to vector<1x256xf32>
    %52 = vector.broadcast %51 : vector<1x256xf32> to vector<8x256xf32>
    %53 = arith.mulf %50, %52 : vector<8x256xf32>
    %c15_i32_10 = arith.constant 15 : i32
    %54 = tpu.dynamic_rotate %45 by %c15_i32_10 dim 1 : vector<8x256xf32>, i32 -> vector<8x256xf32>
    %55 = vector.extract_strided_slice %0 {offsets = [2, 0], sizes = [1, 256], strides = [1, 1]} : vector<9x256xf32> to vector<1x256xf32>
    %56 = vector.broadcast %55 : vector<1x256xf32> to vector<8x256xf32>
    %57 = arith.mulf %54, %56 : vector<8x256xf32>
    %c1_i32_11 = arith.constant 1 : i32
    %58 = tpu.dynamic_rotate %45 by %c1_i32_11 dim 1 : vector<8x256xf32>, i32 -> vector<8x256xf32>
    %59 = vector.extract_strided_slice %0 {offsets = [3, 0], sizes = [1, 256], strides = [1, 1]} : vector<9x256xf32> to vector<1x256xf32>
    %60 = vector.broadcast %59 : vector<1x256xf32> to vector<8x256xf32>
    %61 = arith.mulf %58, %60 : vector<8x256xf32>
    %62 = vector.extract_strided_slice %0 {offsets = [4, 0], sizes = [1, 256], strides = [1, 1]} : vector<9x256xf32> to vector<1x256xf32>
    %63 = vector.broadcast %62 : vector<1x256xf32> to vector<8x256xf32>
    %64 = arith.mulf %45, %63 : vector<8x256xf32>
    %c255_i32_12 = arith.constant 255 : i32
    %65 = tpu.dynamic_rotate %45 by %c255_i32_12 dim 1 : vector<8x256xf32>, i32 -> vector<8x256xf32>
    %66 = vector.extract_strided_slice %0 {offsets = [5, 0], sizes = [1, 256], strides = [1, 1]} : vector<9x256xf32> to vector<1x256xf32>
    %67 = vector.broadcast %66 : vector<1x256xf32> to vector<8x256xf32>
    %68 = arith.mulf %65, %67 : vector<8x256xf32>
    %c241_i32_13 = arith.constant 241 : i32
    %69 = tpu.dynamic_rotate %45 by %c241_i32_13 dim 1 : vector<8x256xf32>, i32 -> vector<8x256xf32>
    %70 = vector.extract_strided_slice %0 {offsets = [6, 0], sizes = [1, 256], strides = [1, 1]} : vector<9x256xf32> to vector<1x256xf32>
    %71 = vector.broadcast %70 : vector<1x256xf32> to vector<8x256xf32>
    %72 = arith.mulf %69, %71 : vector<8x256xf32>
    %c240_i32_14 = arith.constant 240 : i32
    %73 = tpu.dynamic_rotate %45 by %c240_i32_14 dim 1 : vector<8x256xf32>, i32 -> vector<8x256xf32>
    %74 = vector.extract_strided_slice %0 {offsets = [7, 0], sizes = [1, 256], strides = [1, 1]} : vector<9x256xf32> to vector<1x256xf32>
    %75 = vector.broadcast %74 : vector<1x256xf32> to vector<8x256xf32>
    %76 = arith.mulf %73, %75 : vector<8x256xf32>
    %c239_i32_15 = arith.constant 239 : i32
    %77 = tpu.dynamic_rotate %45 by %c239_i32_15 dim 1 : vector<8x256xf32>, i32 -> vector<8x256xf32>
    %78 = vector.extract_strided_slice %0 {offsets = [8, 0], sizes = [1, 256], strides = [1, 1]} : vector<9x256xf32> to vector<1x256xf32>
    %79 = vector.broadcast %78 : vector<1x256xf32> to vector<8x256xf32>
    %80 = arith.mulf %77, %79 : vector<8x256xf32>
    %81 = tpu.concatenate %49, %53, %57, %61, %64, %68, %72, %76, %80 in 0 : vector<8x256xf32>, vector<8x256xf32>, vector<8x256xf32>, vector<8x256xf32>, vector<8x256xf32>, vector<8x256xf32>, vector<8x256xf32>, vector<8x256xf32>, vector<8x256xf32> -> vector<72x256xf32>
    %c0_16 = arith.constant 0 : index
    %c0_17 = arith.constant 0 : index
    %82 = vector.load %arg5[%c0_16, %c0_17] : memref<8x72xbf16, #tpu.memory_space<vmem>>, vector<8x72xbf16>
    %83 = arith.truncf %81 : vector<72x256xf32> to vector<72x256xbf16>
    %cst_18 = arith.constant dense<0.000000e+00> : vector<8x256xf32>
    %84 = tpu.matmul %82, %83, %cst_18 {dimension_numbers = #tpu.dot_dimension_numbers<[1], [0], [0], [1], [0, 0, 1, 1], [], []>} : vector<8x72xbf16>, vector<72x256xbf16>, vector<8x256xf32> -> vector<8x256xf32>
    %c0_19 = arith.constant 0 : index
    %c0_20 = arith.constant 0 : index
    %85 = vector.load %arg6[%c0_19, %c0_20] : memref<8x1xf32, #tpu.memory_space<vmem>>, vector<8x1xf32>
    %86 = vector.broadcast %85 : vector<8x1xf32> to vector<8x256xf32>
    %87 = arith.addf %84, %86 : vector<8x256xf32>
    %cst_21 = arith.constant 0.000000e+00 : f32
    %88 = vector.broadcast %cst_21 : f32 to vector<8x256xf32>
    %89 = arith.maximumf %87, %88 : vector<8x256xf32>
    %c0_22 = arith.constant 0 : index
    %c0_23 = arith.constant 0 : index
    %90 = vector.load %arg7[%c0_22, %c0_23] : memref<8x8xbf16, #tpu.memory_space<vmem>>, vector<8x8xbf16>
    %91 = arith.truncf %89 : vector<8x256xf32> to vector<8x256xbf16>
    %cst_24 = arith.constant dense<0.000000e+00> : vector<8x256xf32>
    %92 = tpu.matmul %90, %91, %cst_24 {dimension_numbers = #tpu.dot_dimension_numbers<[1], [0], [0], [1], [0, 0, 1, 1], [], []>} : vector<8x8xbf16>, vector<8x256xbf16>, vector<8x256xf32> -> vector<8x256xf32>
    %c0_25 = arith.constant 0 : index
    %c0_26 = arith.constant 0 : index
    %93 = vector.load %arg8[%c0_25, %c0_26] : memref<8x1xf32, #tpu.memory_space<vmem>>, vector<8x1xf32>
    %94 = vector.broadcast %93 : vector<8x1xf32> to vector<8x256xf32>
    %95 = arith.addf %92, %94 : vector<8x256xf32>
    %c0_27 = arith.constant 0 : index
    %c0_28 = arith.constant 0 : index
    %96 = vector.load %arg9[%c0_27, %c0_28] : memref<8x256xf32, #tpu.memory_space<vmem>>, vector<8x256xf32>
    tpu.vector_store %arg9[%c0_27, %c0_28], %95 {strides = array<i32>} : memref<8x256xf32, #tpu.memory_space<vmem>>, vector<8x256xf32>,
    return
  }
  func.func @transform_0(%arg0: i32) -> (i32, i32) {
    %c0_i32 = arith.constant 0 : i32
    %c0_i32_0 = arith.constant 0 : i32
    return %c0_i32, %arg0 : i32, i32
  }
  func.func @transform_1(%arg0: i32) -> (i32, i32) {
    %c0_i32 = arith.constant 0 : i32
    %c0_i32_0 = arith.constant 0 : i32
    %c0_i32_1 = arith.constant 0 : i32
    return %c0_i32, %c0_i32_0 : i32, i32
  }
  func.func @transform_2(%arg0: i32) -> (i32, i32) {
    %c0_i32 = arith.constant 0 : i32
    %c0_i32_0 = arith.constant 0 : i32
    %c0_i32_1 = arith.constant 0 : i32
    return %c0_i32, %c0_i32_0 : i32, i32
  }
  func.func @transform_3(%arg0: i32) -> (i32, i32) {
    %c0_i32 = arith.constant 0 : i32
    %c0_i32_0 = arith.constant 0 : i32
    %c0_i32_1 = arith.constant 0 : i32
    return %c0_i32, %c0_i32_0 : i32, i32
  }
  func.func @transform_4(%arg0: i32) -> (i32, i32) {
    %c0_i32 = arith.constant 0 : i32
    %c0_i32_0 = arith.constant 0 : i32
    %c0_i32_1 = arith.constant 0 : i32
    return %c0_i32, %c0_i32_0 : i32, i32
  }
  func.func @transform_5(%arg0: i32) -> (i32, i32) {
    %c0_i32 = arith.constant 0 : i32
    %c0_i32_0 = arith.constant 0 : i32
    %c0_i32_1 = arith.constant 0 : i32
    return %c0_i32, %c0_i32_0 : i32, i32
  }
  func.func @transform_6(%arg0: i32) -> (i32, i32) {
    %c0_i32 = arith.constant 0 : i32
    %c0_i32_0 = arith.constant 0 : i32
    %c0_i32_1 = arith.constant 0 : i32
    return %c0_i32, %c0_i32_0 : i32, i32
  }
  func.func @transform_7(%arg0: i32) -> (i32, i32) {
    %c0_i32 = arith.constant 0 : i32
    %c0_i32_0 = arith.constant 0 : i32
    %c0_i32_1 = arith.constant 0 : i32
    return %c0_i32, %c0_i32_0 : i32, i32
  }
  func.func @transform_8(%arg0: i32) -> (i32, i32) {
    %c0_i32 = arith.constant 0 : i32
    %c0_i32_0 = arith.constant 0 : i32
    return %c0_i32, %arg0 : i32, i32
  }
}

</mosaic_0001>

<llo_original>
// kernel: tail_forward.1
$region0: #{tail_forward.1}
  #allocation0 [shape = 'u32[]', space=smem, size = 0x4, offset = 0x4, fixed_abs, tag = 'smem constant byte address 0x4 - core index']
  #allocation1 [shape = 'u32[72,128]{1,0:T(1,128)}', space=vmem, size = 0x9000, scoped, tag = 'internal scratch']
  %s0 = inlined_call_operand.vmem [shape: f32[8,512], index: 0, kind: input, shape index: {}]
  %s1 = inlined_call_operand.vmem [shape: f32[9,256], index: 1, kind: input, shape index: {}]
  %s2 = inlined_call_operand.vmem [shape: bf16[8,72], index: 2, kind: input, shape index: {}]
  %s3 = inlined_call_operand.vmem [shape: f32[8,1], index: 3, kind: input, shape index: {}]
  %s4 = inlined_call_operand.vmem [shape: bf16[8,72], index: 4, kind: input, shape index: {}]
  %s5 = inlined_call_operand.vmem [shape: f32[8,1], index: 5, kind: input, shape index: {}]
  %s6 = inlined_call_operand.vmem [shape: bf16[8,8], index: 6, kind: input, shape index: {}]
  %s7 = inlined_call_operand.vmem [shape: f32[8,1], index: 7, kind: input, shape index: {}]
  %s8 = inlined_call_operand.vmem [shape: f32[8,512], index: 8, kind: output, shape index: {}]
  %s9 = sld [smem:[#allocation0]]
  $region65: #{tail_forward.1} parent=0
    _
  %s11 = ssub.s32 1, %s9
  %s12 = scalar_select 0, %s11, %s9
  loop: start=0, step=1, limit=4
  $region2: #{tail_forward.1} parent=0 // loop_pre_header
    _
  $region3: #{tail_forward.1} parent=0 // loop_header
    %s14 = sphi 0, %s18
    %p15 = scmp.ge.s32.totalorder %s14, 4
    %s24 = sphi 0, %s26
    %s27 = sphi 0, %s24
    %s28 = sphi 0, %s27
    %s44 = sphi 0, %s28
    %s48 = sphi 0, %s48
    %s50 = sphi 0, %s48
    %s51 = sphi 0, %s50
    %s65 = sphi 0, %s51
    %s69 = sphi 0, %s69
    %s71 = sphi 0, %s69
    %s72 = sphi 0, %s71
    %s86 = sphi 0, %s72
    %s90 = sphi 0, %s90
    %s92 = sphi 0, %s90
    %s93 = sphi 0, %s92
    %s107 = sphi 0, %s93
    %s111 = sphi 0, %s111
    %s113 = sphi 0, %s111
    %s114 = sphi 0, %s113
    %s128 = sphi 0, %s114
    %s132 = sphi 0, %s132
    %s134 = sphi 0, %s132
    %s135 = sphi 0, %s134
    %s149 = sphi 0, %s135
    %s153 = sphi 0, %s153
    %s155 = sphi 0, %s153
    %s156 = sphi 0, %s155
    %s170 = sphi 0, %s156
    %s174 = sphi 0, %s174
    %s176 = sphi 0, %s174
    %s177 = sphi 0, %s176
    %s191 = sphi 0, %s177
    %s197 = sphi 0, %s199
    %s200 = sphi 0, %s197
    %s201 = sphi 0, %s200
    %s217 = sphi 0, %s201
  $region4: #{tail_forward.1} parent=0 // loop_header_branch
    %17 = sbr.rel (%p15) target = $region8
  $region5: #{tail_forward.1} parent=0 // loop_body
    %s19 = ssub.s32 %s14, 1
    %s20 = ssub.s32 %s14, 2
    %s21 = sadd.s32 %s14, 1
    %s22 = ssub.s32 %s14, %s21
    %p23 = scmp.eq.s32.totalorder %s22, 0
    %s25 = sadd.s32 %s24, 1
    %s26 = scalar_select %p23, %s24, %s25
    %p29 = pneg %p23
    %p30 = scmp.eq.s32.totalorder %s14, 1
    %p31 = por %p29, %p30
    %p32 = scmp.ne.s32.totalorder %s24, %s27
    %p33 = scmp.eq.s32.totalorder %s14, 0
    %p34 = por %p32, %p33
    %p35 = scmp.ne.s32.totalorder %s24, %s27
    %p36 = scmp.eq.s32.totalorder %s19, 1
    %p37 = por %p35, %p36
    %p38 = scmp.ne.s32.totalorder %s27, %s28
    %p39 = scmp.eq.s32.totalorder %s19, 0
    %p40 = por %p38, %p39
    %p41 = scmp.ne.s32.totalorder %s27, %s28
    %p42 = scmp.eq.s32.totalorder %s20, 1
    %p43 = por %p41, %p42
    %p45 = scmp.ne.s32.totalorder %s28, %s44
    %p46 = scmp.eq.s32.totalorder %s20, 0
    %p47 = por %p45, %p46
    %s49 = sadd.s32 %s48, 1
    %p52 = scmp.eq.s32.totalorder %s14, 1
    %p53 = scmp.ne.s32.totalorder %s48, %s50
    %p54 = scmp.eq.s32.totalorder %s14, 0
    %p55 = por %p53, %p54
    %p56 = scmp.ne.s32.totalorder %s48, %s50
    %p57 = scmp.eq.s32.totalorder %s19, 1
    %p58 = por %p56, %p57
    %p59 = scmp.ne.s32.totalorder %s50, %s51
    %p60 = scmp.eq.s32.totalorder %s19, 0
    %p61 = por %p59, %p60
    %p62 = scmp.ne.s32.totalorder %s50, %s51
    %p63 = scmp.eq.s32.totalorder %s20, 1
    %p64 = por %p62, %p63
    %p66 = scmp.ne.s32.totalorder %s51, %s65
    %p67 = scmp.eq.s32.totalorder %s20, 0
    %p68 = por %p66, %p67
    %s70 = sadd.s32 %s69, 1
    %p73 = scmp.eq.s32.totalorder %s14, 1
    %p74 = scmp.ne.s32.totalorder %s69, %s71
    %p75 = scmp.eq.s32.totalorder %s14, 0
    %p76 = por %p74, %p75
    %p77 = scmp.ne.s32.totalorder %s69, %s71
    %p78 = scmp.eq.s32.totalorder %s19, 1
    %p79 = por %p77, %p78
    %p80 = scmp.ne.s32.totalorder %s71, %s72
    %p81 = scmp.eq.s32.totalorder %s19, 0
    %p82 = por %p80, %p81
    %p83 = scmp.ne.s32.totalorder %s71, %s72
    %p84 = scmp.eq.s32.totalorder %s20, 1
    %p85 = por %p83, %p84
    %p87 = scmp.ne.s32.totalorder %s72, %s86
    %p88 = scmp.eq.s32.totalorder %s20, 0
    %p89 = por %p87, %p88
    %s91 = sadd.s32 %s90, 1
    %p94 = scmp.eq.s32.totalorder %s14, 1
    %p95 = scmp.ne.s32.totalorder %s90, %s92
    %p96 = scmp.eq.s32.totalorder %s14, 0
    %p97 = por %p95, %p96
    %p98 = scmp.ne.s32.totalorder %s90, %s92
    %p99 = scmp.eq.s32.totalorder %s19, 1
    %p100 = por %p98, %p99
    %p101 = scmp.ne.s32.totalorder %s92, %s93
    %p102 = scmp.eq.s32.totalorder %s19, 0
    %p103 = por %p101, %p102
    %p104 = scmp.ne.s32.totalorder %s92, %s93
    %p105 = scmp.eq.s32.totalorder %s20, 1
    %p106 = por %p104, %p105
    %p108 = scmp.ne.s32.totalorder %s93, %s107
    %p109 = scmp.eq.s32.totalorder %s20, 0
    %p110 = por %p108, %p109
    %s112 = sadd.s32 %s111, 1
    %p115 = scmp.eq.s32.totalorder %s14, 1
    %p116 = scmp.ne.s32.totalorder %s111, %s113
    %p117 = scmp.eq.s32.totalorder %s14, 0
    %p118 = por %p116, %p117
    %p119 = scmp.ne.s32.totalorder %s111, %s113
    %p120 = scmp.eq.s32.totalorder %s19, 1
    %p121 = por %p119, %p120
    %p122 = scmp.ne.s32.totalorder %s113, %s114
    %p123 = scmp.eq.s32.totalorder %s19, 0
    %p124 = por %p122, %p123
    %p125 = scmp.ne.s32.totalorder %s113, %s114
    %p126 = scmp.eq.s32.totalorder %s20, 1
    %p127 = por %p125, %p126
    %p129 = scmp.ne.s32.totalorder %s114, %s128
    %p130 = scmp.eq.s32.totalorder %s20, 0
    %p131 = por %p129, %p130
    %s133 = sadd.s32 %s132, 1
    %p136 = scmp.eq.s32.totalorder %s14, 1
    %p137 = scmp.ne.s32.totalorder %s132, %s134
    %p138 = scmp.eq.s32.totalorder %s14, 0
    %p139 = por %p137, %p138
    %p140 = scmp.ne.s32.totalorder %s132, %s134
    %p141 = scmp.eq.s32.totalorder %s19, 1
    %p142 = por %p140, %p141
    %p143 = scmp.ne.s32.totalorder %s134, %s135
    %p144 = scmp.eq.s32.totalorder %s19, 0
    %p145 = por %p143, %p144
    %p146 = scmp.ne.s32.totalorder %s134, %s135
    %p147 = scmp.eq.s32.totalorder %s20, 1
    %p148 = por %p146, %p147
    %p150 = scmp.ne.s32.totalorder %s135, %s149
    %p151 = scmp.eq.s32.totalorder %s20, 0
    %p152 = por %p150, %p151
    %s154 = sadd.s32 %s153, 1
    %p157 = scmp.eq.s32.totalorder %s14, 1
    %p158 = scmp.ne.s32.totalorder %s153, %s155
    %p159 = scmp.eq.s32.totalorder %s14, 0
    %p160 = por %p158, %p159
    %p161 = scmp.ne.s32.totalorder %s153, %s155
    %p162 = scmp.eq.s32.totalorder %s19, 1
    %p163 = por %p161, %p162
    %p164 = scmp.ne.s32.totalorder %s155, %s156
    %p165 = scmp.eq.s32.totalorder %s19, 0
    %p166 = por %p164, %p165
    %p167 = scmp.ne.s32.totalorder %s155, %s156
    %p168 = scmp.eq.s32.totalorder %s20, 1
    %p169 = por %p167, %p168
    %p171 = scmp.ne.s32.totalorder %s156, %s170
    %p172 = scmp.eq.s32.totalorder %s20, 0
    %p173 = por %p171, %p172
    %s175 = sadd.s32 %s174, 1
    %p178 = scmp.eq.s32.totalorder %s14, 1
    %p179 = scmp.ne.s32.totalorder %s174, %s176
    %p180 = scmp.eq.s32.totalorder %s14, 0
    %p181 = por %p179, %p180
    %p182 = scmp.ne.s32.totalorder %s174, %s176
    %p183 = scmp.eq.s32.totalorder %s19, 1
    %p184 = por %p182, %p183
    %p185 = scmp.ne.s32.totalorder %s176, %s177
    %p186 = scmp.eq.s32.totalorder %s19, 0
    %p187 = por %p185, %p186
    %p188 = scmp.ne.s32.totalorder %s176, %s177
    %p189 = scmp.eq.s32.totalorder %s20, 1
    %p190 = por %p188, %p189
    %p192 = scmp.ne.s32.totalorder %s177, %s191
    %p193 = scmp.eq.s32.totalorder %s20, 0
    %p194 = por %p192, %p193
    %s195 = ssub.s32 %s14, %s21
    %p196 = scmp.eq.s32.totalorder %s195, 0
    %s198 = sadd.s32 %s197, 1
    %s199 = scalar_select %p196, %s197, %s198
    %p202 = pneg %p196
    %p203 = scmp.eq.s32.totalorder %s14, 1
    %p204 = por %p202, %p203
    %p205 = scmp.ne.s32.totalorder %s197, %s200
    %p206 = scmp.eq.s32.totalorder %s14, 0
    %p207 = por %p205, %p206
    %p208 = scmp.ne.s32.totalorder %s197, %s200
    %p209 = scmp.eq.s32.totalorder %s19, 1
    %p210 = por %p208, %p209
    %p211 = scmp.ne.s32.totalorder %s200, %s201
    %p212 = scmp.eq.s32.totalorder %s19, 0
    %p213 = por %p211, %p212
    %p214 = scmp.ne.s32.totalorder %s200, %s201
    %p215 = scmp.eq.s32.totalorder %s20, 1
    %p216 = por %p214, %p215
    %p218 = scmp.ne.s32.totalorder %s201, %s217
    %p219 = scmp.eq.s32.totalorder %s20, 0
    %p220 = por %p218, %p219
    %p221 = scmp.le.s32.totalorder 1, %s14
    %p222 = scmp.lt.s32.totalorder %s14, 3
    %p223 = pnand %p221, %p222
    %p224 = pneg %p223
    // Predicated region
    $region9: #{tail_forward.1} parent=5 // pred_check
      _
    $region10: #{tail_forward.1} parent=5 // pred_check_branch
      %226 = sbr.rel (%p223) target = $region12
    $region11: #{tail_forward.1} parent=5 // pred_region
      %s227 = ssub.s32 %s14, 1
      // Predicated region
      $region13: #{tail_forward.1} parent=11 // pred_check
        %p228 = pneg %p61
      $region14: #{tail_forward.1} parent=11 // pred_check_branch
        %230 = sbr.rel (%p228) target = $region16
      $region15: #{tail_forward.1} parent=11 // pred_region
        _
      $region16: #{tail_forward.1} parent=11 // pred_fallthru
        _
      // Predicated region
      $region17: #{tail_forward.1} parent=11 // pred_check
        %p231 = pneg %p82
      $region18: #{tail_forward.1} parent=11 // pred_check_branch
        %233 = sbr.rel (%p231) target = $region20
      $region19: #{tail_forward.1} parent=11 // pred_region
        _
      $region20: #{tail_forward.1} parent=11 // pred_fallthru
        _
      // Predicated region
      $region21: #{tail_forward.1} parent=11 // pred_check
        %p234 = pneg %p103
      $region22: #{tail_forward.1} parent=11 // pred_check_branch
        %236 = sbr.rel (%p234) target = $region24
      $region23: #{tail_forward.1} parent=11 // pred_region
        _
      $region24: #{tail_forward.1} parent=11 // pred_fallthru
        _
      // Predicated region
      $region25: #{tail_forward.1} parent=11 // pred_check
        %p237 = pneg %p124
      $region26: #{tail_forward.1} parent=11 // pred_check_branch
        %239 = sbr.rel (%p237) target = $region28
      $region27: #{tail_forward.1} parent=11 // pred_region
        _
      $region28: #{tail_forward.1} parent=11 // pred_fallthru
        _
      // Predicated region
      $region29: #{tail_forward.1} parent=11 // pred_check
        %p240 = pneg %p145
      $region30: #{tail_forward.1} parent=11 // pred_check_branch
        %242 = sbr.rel (%p240) target = $region32
      $region31: #{tail_forward.1} parent=11 // pred_region
        _
      $region32: #{tail_forward.1} parent=11 // pred_fallthru
        _
      // Predicated region
      $region33: #{tail_forward.1} parent=11 // pred_check
        %p243 = pneg %p166
      $region34: #{tail_forward.1} parent=11 // pred_check_branch
        %245 = sbr.rel (%p243) target = $region36
      $region35: #{tail_forward.1} parent=11 // pred_region
        _
      $region36: #{tail_forward.1} parent=11 // pred_fallthru
        _
      // Predicated region
      $region37: #{tail_forward.1} parent=11 // pred_check
        %p246 = pneg %p187
      $region38: #{tail_forward.1} parent=11 // pred_check_branch
        %248 = sbr.rel (%p246) target = $region40
      $region39: #{tail_forward.1} parent=11 // pred_region
        _
      $region40: #{tail_forward.1} parent=11 // pred_fallthru
        _
    $region12: #{tail_forward.1} parent=5 // pred_fallthru
      _
    %p249 = scmp.lt.s32.totalorder %s14, 2
    // Predicated region
    $region41: #{tail_forward.1} parent=5 // pred_check
      %p250 = pneg %p249
    $region42: #{tail_forward.1} parent=5 // pred_check_branch
      %252 = sbr.rel (%p250) target = $region44
    $region43: #{tail_forward.1} parent=5 // pred_region
      // Predicated region
      $region45: #{tail_forward.1} parent=43 // pred_check
        %p253 = pneg %p34
      $region46: #{tail_forward.1} parent=43 // pred_check_branch
        %255 = sbr.rel (%p253) target = $region48
      $region47: #{tail_forward.1} parent=43 // pred_region
        %s256 = smul.u32 2, %s14
        %p257 = scmp.lt.s32.totalorder %s256, 3
        %s258 = scalar_select %p257, %s256, 3
        %s259 = smul.addr %s258, 8
        %s260 = scalar_lea.vmem %s0, %s259
        %s261 = smul.u32 2, %s14
      $region48: #{tail_forward.1} parent=43 // pred_fallthru
        _
    $region44: #{tail_forward.1} parent=5 // pred_fallthru
      _
    %p262 = scmp.le.s32.totalorder 1, %s14
    %p263 = scmp.lt.s32.totalorder %s14, 3
    %p264 = pnand %p262, %p263
    %p265 = pneg %p264
    // Predicated region
    $region49: #{tail_forward.1} parent=5 // pred_check
      _
    $region50: #{tail_forward.1} parent=5 // pred_check_branch
      %267 = sbr.rel (%p264) target = $region52
    $region51: #{tail_forward.1} parent=5 // pred_region
      %s268 = ssub.s32 %s14, 1
      %s269 = smul.u32 2, %s19
      %p270 = scmp.lt.s32.totalorder %s269, 3
      %s271 = scalar_select %p270, %s269, 3
      %s272 = smul.addr %s271, 8
      %s273 = scalar_lea.vmem %s0, %s272
      %p274 = pneg %p40
      %p275 = pneg %p37
      %p276 = pneg %p61
      %p277 = pneg %p58
      %p278 = pneg %p82
      %p279 = pneg %p79
      %p280 = pneg %p103
      %p281 = pneg %p100
      %p282 = pneg %p124
      %p283 = pneg %p121
      %p284 = pneg %p145
      %p285 = pneg %p142
      %p286 = pneg %p166
      %p287 = pneg %p163
      %p288 = pneg %p187
      %p289 = pneg %p184
      %p290 = pneg %p213
      %p291 = pneg %p210
      %s292 = smul.u32 2, %s19
      %p293 = scmp.lt.s32.totalorder %s292, 3
      %s294 = scalar_select %p293, %s292, 3
      %s295 = smul.addr %s294, 8
      %s296 = scalar_lea.vmem %s8, %s295
      %s297 = smul.u32 2, %s19
      %p298 = scmp.lt.s32.totalorder %s297, 3
      %s299 = scalar_select %p298, %s297, 3
      %s300 = smul.addr %s299, 8
      %s301 = scalar_lea.vmem %s0, %s300
      %s302 = smul.u32 2, %s19
      %s303 = smul.u32 2, %s19
      %p304 = scmp.lt.s32.totalorder %s303, 3
      %s305 = scalar_select %p304, %s303, 3
      %s306 = smul.addr %s305, 8
      %s307 = scalar_lea.vmem %s8, %s306
      %s308 = smul.u32 2, %s19
      %v310 = vld [vmem:[%s1] sm:$0xff]
      %v311 = vld [vmem:[%s1 + $0x8] sm:$0xff]
      %v312 = vld [vmem:[%s1 + $0x10] sm:$0x1]
      %v313 = vld [vmem:[%s1 + $0x18] sm:$0x1]
      %v314 = vld [vmem:[%s301] sm:$0xff]
      %v315 = vld [vmem:[%s301 + $0x8] sm:$0xff]
      %316 = vrot.lane.b32.xlu0 %v314, 17
      %v317 = vpop.permute.xlu0 %316
      %318 = vrot.lane.b32.xlu0 %v315, 17
      %v319 = vpop.permute.xlu0 %318
      %v320 = vlaneseq
      %v321 = vand.u32 %v320, 127
      %vm322 = vcmp.lt.s32.totalorder %v321, 17
      %v323 = vsel %vm322, %v317, %v319
      %v324 = vsel %vm322, %v319, %v317
      %v325 = vperm.slane %v310, 0
      %v326 = vperm.slane %v311, 0
      %v327 = vmul.f32 %v324, %v325
      %v328 = vmul.f32 %v323, %v326
      %329 = vrot.lane.b32.xlu0 %v314, 16
      %v330 = vpop.permute.xlu0 %329
      %331 = vrot.lane.b32.xlu0 %v315, 16
      %v332 = vpop.permute.xlu0 %331
      %vm333 = vcmp.lt.s32.totalorder %v321, 16
      %v334 = vsel %vm333, %v330, %v332
      %v335 = vsel %vm333, %v332, %v330
      %v336 = vperm.slane %v310, 1
      %v337 = vperm.slane %v311, 1
      %v338 = vmul.f32 %v335, %v336
      %v339 = vmul.f32 %v334, %v337
      %340 = vrot.lane.b32.xlu0 %v314, 15
      %v341 = vpop.permute.xlu0 %340
      %342 = vrot.lane.b32.xlu0 %v315, 15
      %v343 = vpop.permute.xlu0 %342
      %vm344 = vcmp.lt.s32.totalorder %v321, 15
      %v345 = vsel %vm344, %v341, %v343
      %v346 = vsel %vm344, %v343, %v341
      %v347 = vperm.slane %v310, 2
      %v348 = vperm.slane %v311, 2
      %v349 = vmul.f32 %v346, %v347
      %v350 = vmul.f32 %v345, %v348
      %351 = vrot.lane.b32.xlu0 %v314, 1
      %v352 = vpop.permute.xlu0 %351
      %353 = vrot.lane.b32.xlu0 %v315, 1
      %v354 = vpop.permute.xlu0 %353
      %vm355 = vcmp.lt.s32.totalorder %v321, 1
      %v356 = vsel %vm355, %v352, %v354
      %v357 = vsel %vm355, %v354, %v352
      %v358 = vperm.slane %v310, 3
      %v359 = vperm.slane %v311, 3
      %v360 = vmul.f32 %v357, %v358
      %v361 = vmul.f32 %v356, %v359
      %v362 = vperm.slane %v310, 4
      %v363 = vperm.slane %v311, 4
      %v364 = vmul.f32 %v314, %v362
      %v365 = vmul.f32 %v315, %v363
      %366 = vrot.lane.b32.xlu0 %v314, 127
      %v367 = vpop.permute.xlu0 %366
      %368 = vrot.lane.b32.xlu0 %v315, 127
      %v369 = vpop.permute.xlu0 %368
      %vm370 = vcmp.lt.s32.totalorder %v321, 127
      %v371 = vsel %vm370, %v367, %v369
      %v372 = vsel %vm370, %v369, %v367
      %v373 = vperm.slane %v310, 5
      %v374 = vperm.slane %v311, 5
      %v375 = vmul.f32 %v371, %v373
      %v376 = vmul.f32 %v372, %v374
      %377 = vrot.lane.b32.xlu0 %v314, 113
      %v378 = vpop.permute.xlu0 %377
      %379 = vrot.lane.b32.xlu0 %v315, 113
      %v380 = vpop.permute.xlu0 %379
      %vm381 = vcmp.lt.s32.totalorder %v321, 113
      %v382 = vsel %vm381, %v378, %v380
      %v383 = vsel %vm381, %v380, %v378
      %v384 = vperm.slane %v310, 6
      %v385 = vperm.slane %v311, 6
      %v386 = vmul.f32 %v382, %v384
      %v387 = vmul.f32 %v383, %v385
      %388 = vrot.lane.b32.xlu0 %v314, 112
      %v389 = vpop.permute.xlu0 %388
      %390 = vrot.lane.b32.xlu0 %v315, 112
      %v391 = vpop.permute.xlu0 %390
      %vm392 = vcmp.lt.s32.totalorder %v321, 112
      %v393 = vsel %vm392, %v389, %v391
      %v394 = vsel %vm392, %v391, %v389
      %v395 = vperm.slane %v310, 7
      %v396 = vperm.slane %v311, 7
      %v397 = vmul.f32 %v393, %v395
      %v398 = vmul.f32 %v394, %v396
      %399 = vrot.lane.b32.xlu0 %v314, 111
      %v400 = vpop.permute.xlu0 %399
      %401 = vrot.lane.b32.xlu0 %v315, 111
      %v402 = vpop.permute.xlu0 %401
      %vm403 = vcmp.lt.s32.totalorder %v321, 111
      %v404 = vsel %vm403, %v400, %v402
      %v405 = vsel %vm403, %v402, %v400
      %v406 = vperm.slane %v312, 0
      %v407 = vperm.slane %v313, 0
      %v408 = vmul.f32 %v404, %v406
      %v409 = vmul.f32 %v405, %v407
      %v410 = vld [vmem:[%s2] sm:$0xf]
      %v411 = vpack.c.bf16 %v338, %v327
      %v412 = vpack.c.bf16 %v339, %v328
      %v413 = vpack.c.bf16 %v360, %v349
      %v414 = vpack.c.bf16 %v361, %v350
      %v415 = vpack.c.bf16 %v375, %v364
      %v416 = vpack.c.bf16 %v376, %v365
      %v417 = vpack.c.bf16 %v397, %v386
      %v418 = vpack.c.bf16 %v398, %v387
      %v419 = vpack.c.bf16 %v408, %v408
      %v420 = vpack.c.bf16 %v409, %v409
      %v421 = vld [vmem:[%s3] sm:$0xff]
      %423 = vset.pattern.permute.xlu0 0
      %424 = vperm.xlu0 %423, %v421
      %v425 = vpop.permute.xlu0 %424
      %vm427 = vcmask 588800
      %v429 = vsel %vm427, %v410, 0
      %vm431 = vcmask 1043456
      %v433 = vsel %vm431, %v419, 0
      %v436 = vsel %vm431, %v420, 0
      %438 = vmatpush.bf16.msra.mxu0 0
      %439 = vmatpush.bf16.msra.mxu0 0
      %440 = vmatpush.bf16.msra.mxu0 0
      %441 = vmatpush.bf16.msra.mxu0 %v433
      %442 = vmatpush.bf16.msra.mxu0 %v417
      %443 = vmatpush.bf16.msra.mxu0 %v415
      %444 = vmatpush.bf16.msra.mxu0 %v413
      %445 = vmatpush.bf16.msra.mxu0 %v411
      %446 = vmatmul.bf16.gmra.mxu0 %v429
      %v447 = vpop.f32.mrf.mxu0
      %v448 = vadd.f32 %v425, %v447
      %v449 = vpop.f32.mrf.mxu0
      %450 = vdwg.mxu0
      %451 = vmatpush.bf16.msra.mxu0 0
      %452 = vmatpush.bf16.msra.mxu0 0
      %453 = vmatpush.bf16.msra.mxu0 0
      %454 = vmatpush.bf16.msra.mxu0 %v436
      %455 = vmatpush.bf16.msra.mxu0 %v418
      %456 = vmatpush.bf16.msra.mxu0 %v416
      %457 = vmatpush.bf16.msra.mxu0 %v414
      %458 = vmatpush.bf16.msra.mxu0 %v412
      %459 = vmatmul.bf16.gmra.mxu0 %v429
      %v460 = vpop.f32.mrf.mxu0
      %v461 = vadd.f32 %v425, %v460
      %v462 = vpop.f32.mrf.mxu0
      %463 = vdwg.mxu0
      %v464 = vmax.f32 %v448, 0.0
      %v465 = vmax.f32 %v461, 0.0
      %466 = vrot.lane.b32.xlu0 %v464, 17
      %v467 = vpop.permute.xlu0 %466
      %468 = vrot.lane.b32.xlu0 %v465, 17
      %v469 = vpop.permute.xlu0 %468
      %v470 = vsel %vm322, %v467, %v469
      %v471 = vsel %vm322, %v469, %v467
      %v472 = vmul.f32 %v471, %v325
      %v473 = vmul.f32 %v470, %v326
      %474 = vrot.lane.b32.xlu0 %v464, 16
      %v475 = vpop.permute.xlu0 %474
      %476 = vrot.lane.b32.xlu0 %v465, 16
      %v477 = vpop.permute.xlu0 %476
      %v478 = vsel %vm333, %v475, %v477
      %v479 = vsel %vm333, %v477, %v475
      %v480 = vmul.f32 %v479, %v336
      %v481 = vmul.f32 %v478, %v337
      %482 = vrot.lane.b32.xlu0 %v464, 15
      %v483 = vpop.permute.xlu0 %482
      %484 = vrot.lane.b32.xlu0 %v465, 15
      %v485 = vpop.permute.xlu0 %484
      %v486 = vsel %vm344, %v483, %v485
      %v487 = vsel %vm344, %v485, %v483
      %v488 = vmul.f32 %v487, %v347
      %v489 = vmul.f32 %v486, %v348
      %490 = vrot.lane.b32.xlu0 %v464, 1
      %v491 = vpop.permute.xlu0 %490
      %492 = vrot.lane.b32.xlu0 %v465, 1
      %v493 = vpop.permute.xlu0 %492
      %v494 = vsel %vm355, %v491, %v493
      %v495 = vsel %vm355, %v493, %v491
      %v496 = vmul.f32 %v495, %v358
      %v497 = vmul.f32 %v494, %v359
      %v498 = vmul.f32 %v464, %v362
      %v499 = vmul.f32 %v465, %v363
      %500 = vrot.lane.b32.xlu0 %v464, 127
      %v501 = vpop.permute.xlu0 %500
      %502 = vrot.lane.b32.xlu0 %v465, 127
      %v503 = vpop.permute.xlu0 %502
      %v504 = vsel %vm370, %v501, %v503
      %v505 = vsel %vm370, %v503, %v501
      %v506 = vmul.f32 %v504, %v373
      %v507 = vmul.f32 %v505, %v374
      %508 = vrot.lane.b32.xlu0 %v464, 113
      %v509 = vpop.permute.xlu0 %508
      %510 = vrot.lane.b32.xlu0 %v465, 113
      %v511 = vpop.permute.xlu0 %510
      %v512 = vsel %vm381, %v509, %v511
      %v513 = vsel %vm381, %v511, %v509
      %v514 = vmul.f32 %v512, %v384
      %v515 = vmul.f32 %v513, %v385
      %516 = vrot.lane.b32.xlu0 %v464, 112
      %v517 = vpop.permute.xlu0 %516
      %518 = vrot.lane.b32.xlu0 %v465, 112
      %v519 = vpop.permute.xlu0 %518
      %v520 = vsel %vm392, %v517, %v519
      %v521 = vsel %vm392, %v519, %v517
      %v522 = vmul.f32 %v520, %v395
      %v523 = vmul.f32 %v521, %v396
      %524 = vrot.lane.b32.xlu0 %v464, 111
      %v525 = vpop.permute.xlu0 %524
      %526 = vrot.lane.b32.xlu0 %v465, 111
      %v527 = vpop.permute.xlu0 %526
      %v528 = vsel %vm403, %v525, %v527
      %v529 = vsel %vm403, %v527, %v525
      %v530 = vmul.f32 %v528, %v406
      %v531 = vmul.f32 %v529, %v407
      %v532 = vld [vmem:[%s4] sm:$0xf]
      %v533 = vpack.c.bf16 %v480, %v472
      %v534 = vpack.c.bf16 %v481, %v473
      %v535 = vpack.c.bf16 %v496, %v488
      %v536 = vpack.c.bf16 %v497, %v489
      %v537 = vpack.c.bf16 %v506, %v498
      %v538 = vpack.c.bf16 %v507, %v499
      %v539 = vpack.c.bf16 %v522, %v514
      %v540 = vpack.c.bf16 %v523, %v515
      %v541 = vpack.c.bf16 %v530, %v530
      %v542 = vpack.c.bf16 %v531, %v531
      %v543 = vld [vmem:[%s5] sm:$0xff]
      %545 = vset.pattern.permute.xlu0 0
      %546 = vperm.xlu0 %545, %v543
      %v547 = vpop.permute.xlu0 %546
      %v550 = vsel %vm427, %v532, 0
      %v553 = vsel %vm431, %v541, 0
      %v556 = vsel %vm431, %v542, 0
      %558 = vmatpush.bf16.msra.mxu0 0
      %559 = vmatpush.bf16.msra.mxu0 0
      %560 = vmatpush.bf16.msra.mxu0 0
      %561 = vmatpush.bf16.msra.mxu0 %v553
      %562 = vmatpush.bf16.msra.mxu0 %v539
      %563 = vmatpush.bf16.msra.mxu0 %v537
      %564 = vmatpush.bf16.msra.mxu0 %v535
      %565 = vmatpush.bf16.msra.mxu0 %v533
      %566 = vmatmul.bf16.gmra.mxu0 %v550
      %v567 = vpop.f32.mrf.mxu0
      %v568 = vadd.f32 %v547, %v567
      %v569 = vpop.f32.mrf.mxu0
      %570 = vdwg.mxu0
      %571 = vmatpush.bf16.msra.mxu0 0
      %572 = vmatpush.bf16.msra.mxu0 0
      %573 = vmatpush.bf16.msra.mxu0 0
      %574 = vmatpush.bf16.msra.mxu0 %v556
      %575 = vmatpush.bf16.msra.mxu0 %v540
      %576 = vmatpush.bf16.msra.mxu0 %v538
      %577 = vmatpush.bf16.msra.mxu0 %v536
      %578 = vmatpush.bf16.msra.mxu0 %v534
      %579 = vmatmul.bf16.gmra.mxu0 %v550
      %v580 = vpop.f32.mrf.mxu0
      %v581 = vadd.f32 %v547, %v580
      %v582 = vpop.f32.mrf.mxu0
      %583 = vdwg.mxu0
      %v584 = vmax.f32 %v568, 0.0
      %v585 = vmax.f32 %v581, 0.0
      %v586 = vld [vmem:[%s6] sm:$0xf]
      %v587 = vpack.c.bf16 %v584, %v584
      %v588 = vpack.c.bf16 %v585, %v585
      %v589 = vld [vmem:[%s7] sm:$0xff]
      %591 = vset.pattern.permute.xlu0 0
      %592 = vperm.xlu0 %591, %v589
      %v593 = vpop.permute.xlu0 %592
      %vm595 = vcmask 64512
      %v597 = vsel %vm595, %v586, 0
      %v600 = vsel %vm431, %v587, 0
      %v603 = vsel %vm431, %v588, 0
      %605 = vmatpush.bf16.msra.mxu0 0
      %606 = vmatpush.bf16.msra.mxu0 0
      %607 = vmatpush.bf16.msra.mxu0 0
      %608 = vmatpush.bf16.msra.mxu0 0
      %609 = vmatpush.bf16.msra.mxu0 0
      %610 = vmatpush.bf16.msra.mxu0 0
      %611 = vmatpush.bf16.msra.mxu0 0
      %612 = vmatpush.bf16.msra.mxu0 %v600
      %613 = vmatmul.bf16.gmra.mxu0 %v597
      %v614 = vpop.f32.mrf.mxu0
      %v615 = vadd.f32 %v593, %v614
      %v616 = vpop.f32.mrf.mxu0
      %617 = vdwg.mxu0
      %618 = vmatpush.bf16.msra.mxu0 0
      %619 = vmatpush.bf16.msra.mxu0 0
      %620 = vmatpush.bf16.msra.mxu0 0
      %621 = vmatpush.bf16.msra.mxu0 0
      %622 = vmatpush.bf16.msra.mxu0 0
      %623 = vmatpush.bf16.msra.mxu0 0
      %624 = vmatpush.bf16.msra.mxu0 0
      %625 = vmatpush.bf16.msra.mxu0 %v603
      %626 = vmatmul.bf16.gmra.mxu0 %v597
      %v627 = vpop.f32.mrf.mxu0
      %v628 = vadd.f32 %v593, %v627
      %v629 = vpop.f32.mrf.mxu0
      %630 = vdwg.mxu0
      %631 = vst [vmem:[%s307] sm:$0xff] %v615
      %632 = vst [vmem:[%s307 + $0x8] sm:$0xff] %v628
      %s633 = smul.u32 2, %s19
      %p634 = scmp.lt.s32.totalorder %s633, 3
      %s635 = scalar_select %p634, %s633, 3
      %s636 = smul.addr %s635, 8
      %s637 = scalar_lea.vmem %s8, %s636
      // Predicated region
      $region53: #{tail_forward.1} parent=51 // pred_check
        %p638 = pneg %p210
      $region54: #{tail_forward.1} parent=51 // pred_check_branch
        %640 = sbr.rel (%p638) target = $region56
      $region55: #{tail_forward.1} parent=51 // pred_region
        %s641 = smul.u32 2, %s19
      $region56: #{tail_forward.1} parent=51 // pred_fallthru
        _
    $region52: #{tail_forward.1} parent=5 // pred_fallthru
      _
    %p642 = scmp.le.s32.totalorder 2, %s14
    // Predicated region
    $region57: #{tail_forward.1} parent=5 // pred_check
      %p643 = pneg %p642
    $region58: #{tail_forward.1} parent=5 // pred_check_branch
      %645 = sbr.rel (%p643) target = $region60
    $region59: #{tail_forward.1} parent=5 // pred_region
      %s646 = ssub.s32 %s14, 2
      // Predicated region
      $region61: #{tail_forward.1} parent=59 // pred_check
        %p647 = pneg %p216
      $region62: #{tail_forward.1} parent=59 // pred_check_branch
        %649 = sbr.rel (%p647) target = $region64
      $region63: #{tail_forward.1} parent=59 // pred_region
        %s650 = smul.u32 2, %s20
        %p651 = scmp.lt.s32.totalorder %s650, 3
        %s652 = scalar_select %p651, %s650, 3
        %s653 = smul.addr %s652, 8
        %s654 = scalar_lea.vmem %s8, %s653
      $region64: #{tail_forward.1} parent=59 // pred_fallthru
        _
    $region60: #{tail_forward.1} parent=5 // pred_fallthru
      _
  $region6: #{tail_forward.1} parent=0 // loop_footer
    %s18 = sadd.s32 1, %s14
  $region7: #{tail_forward.1} parent=0 // loop_footer_branch
    %13 = sbr.rel target = $region3
  $region8: #{tail_forward.1} parent=0 // loop_exit
    _

</llo_original>
